<compile_context>
chip_gen: v5e
topology: v5e:2x2
jax: 0.10.0
libtpu: 0.0.40
codegen_flags: <defaults>
</compile_context>

<pallas_src>
import functools

import jax
import jax.numpy as jnp
from jax.experimental import pallas as pl
from jax.experimental.pallas import tpu as pltpu

NEG_SLOPE = 0.01  # nn.LeakyReLU default negative slope


# ----------------------------- Pallas kernel --------------------------------


def _fused_kernel(x_ref, *refs, depth, K, dils, W, pad0, p_act, Cin, F, TBH):
    """Fused netwise _TemporalFilter forward for one (batch, row-tile) block.

    x_ref : (Cin, TBH, W)  input rows (NCHW block, leading N squeezed)
    refs  : w_0, b_0, ..., w_{depth-1}, b_{depth-1}, br, o_ref, xp, [act]
        w_0 : (2F, K*Cin_pad)  layer-0 im2col weight, residual rows appended
        w_i : (F, K*F)         deeper-layer im2col weights (k-major columns)
        b_i : (F, 1) f32, br : (F, 1) f32
        o_ref : (F, TBH, W) f32
        xp    : (Cin_pad, W + 2*pad0)   VMEM padded-input scratch
        act   : (F, W + 2*p_act)        VMEM inter-layer activation scratch
    """
    w_refs = [refs[2 * i] for i in range(depth)]
    b_refs = [refs[2 * i + 1] for i in range(depth)]
    br_ref = refs[2 * depth]
    o_ref = refs[2 * depth + 1]
    xp_ref = refs[2 * depth + 2]
    act_ref = refs[2 * depth + 3] if depth > 1 else None
    cdt = xp_ref.dtype

    # Re-establish the zero halo / zero padded-channel rows every step
    # (megacore-safe; see header comment).  All row iterations below only ever
    # write the centre columns, so the halos stay valid zero padding.
    xp_ref[...] = jnp.zeros(xp_ref.shape, cdt)
    if act_ref is not None and p_act > 0:
        halo = jnp.zeros((F, p_act), cdt)
        act_ref[:, :p_act] = halo
        act_ref[:, p_act + W:] = halo

    # Hoist constant loads out of the row loop.
    w_mats = [w_refs[i][...] for i in range(depth)]
    b_vecs = [b_refs[i][...] for i in range(depth)]  # (F, 1) f32
    br = br_ref[...]                                 # (F, 1) f32

    def dilated_conv(src_ref, base, dil, w_mat):
        # (1, K) dilated conv along the time/lane axis as ONE im2col matmul.
        pad = dil * (K - 1) // 2
        taps = [src_ref[:, base - pad + k * dil: base - pad + k * dil + W]
                for k in range(K)]                    # K x (C, W), lane shifts
        xs = jnp.concatenate(taps, axis=0)            # (K*C, W)
        return jnp.dot(w_mat, xs, preferred_element_type=jnp.float32)

    for r in range(TBH):  # statically unrolled rows within this grid step
        # Per-row "same" zero padding, done in VMEM (no HBM pad pass).
        xp_ref[0:Cin, pad0:pad0 + W] = x_ref[:, r, :]

        # Layer 0 with the 1x1 residual fused as F extra output rows
        # (centre-tap columns hold wr, so rows [F:2F) == wr @ x).
        acc0 = dilated_conv(xp_ref, pad0, dils[0], w_mats[0])    # (2F, W) f32
        h = acc0[:F, :] + b_vecs[0]
        h = jnp.where(h >= 0, h, NEG_SLOPE * h)
        res = acc0[F:, :]                                        # (F, W) f32

        for i in range(1, depth):
            act_ref[:, p_act:p_act + W] = h.astype(cdt)
            acc = dilated_conv(act_ref, p_act, dils[i], w_mats[i]) + b_vecs[i]
            h = jnp.where(acc >= 0, acc, NEG_SLOPE * acc)

        o_ref[:, r, :] = (h + res + br).astype(o_ref.dtype)


# ------------------------------ JAX wrapper ----------------------------------


def _choose_tbh(H, Cin, F, W, itemsize, budget_bytes=8 * 2**20):
    """Largest H-row tile that keeps double-buffered in/out blocks in budget
    while respecting the (8, 128) block-shape rule (tile == H or tile % 8 == 0)."""
    def fits(t):
        return 2 * t * W * (Cin * itemsize + F * 4) <= budget_bytes

    if fits(H):
        return H
    cands = [d for d in range(H, 0, -1) if H % d == 0 and d % 8 == 0 and fits(d)]
    if cands:
        return cands[0]
    return 8 if H % 8 == 0 else H


def temporal_filter_forward(x_nchw, params, *, compute_dtype=jnp.bfloat16,
                            tbh=None):
    """x_nchw: (N, n_chans, H, W) -> (N, filters, H, W), 'netwise' residual.

    compute_dtype: dtype of matmul operands (weights / input / activation
    scratch).  Accumulation and all elementwise math stay float32.
    """
    N, Cin, H, W = x_nchw.shape
    layers = params["layers"]            # [(w (F, Cin_i, K), b (F,), dil), ...]
    wr, br = params["residual"]          # (F, Cin), (F,)
    depth = len(layers)
    K = int(layers[0][0].shape[-1])
    F = int(wr.shape[0])
    dils = tuple(int(l[2]) for l in layers)
    pads = [d * (K - 1) // 2 for d in dils]
    pad0 = pads[0]                       # layer 0 has the largest dilation
    p_act = max(pads[1:]) if depth > 1 else 0

    cdt = jnp.dtype(compute_dtype)
    sub = 8 * (4 // cdt.itemsize)        # sublane tile rows: 8 (f32) / 16 (bf16)
    Cin_pad = -(-Cin // sub) * sub       # zero-pad layer-0 channels to the tile

    if tbh is None:
        tbh = _choose_tbh(H, Cin, F, W, cdt.itemsize)
    assert H % tbh == 0, (H, tbh)

    # ---- host-side weight prep -------------------------------------------
    # Layer-0 im2col weight (k-major columns, channel-padded), with the 1x1
    # residual appended as F extra output rows in the centre-tap columns.
    w0, b0, _ = layers[0]
    w0_t = jnp.transpose(w0, (0, 2, 1))                            # (F, K, Cin)
    w0_p = jnp.zeros((F, K, Cin_pad), jnp.float32).at[:, :, :Cin].set(w0_t)
    wr_p = jnp.zeros((F, K, Cin_pad), jnp.float32).at[:, (K - 1) // 2, :Cin].set(wr)
    w0_aug = jnp.concatenate([w0_p, wr_p], axis=0).reshape(2 * F, K * Cin_pad)

    inputs = [x_nchw.astype(cdt)]
    in_specs = [pl.BlockSpec((None, Cin, tbh, W),
                             lambda n, h: (n, 0, h, 0))]

    def add_const(arr):                  # constant operands (2-D), never re-fetched
        inputs.append(arr)
        in_specs.append(pl.BlockSpec(arr.shape, lambda n, h: (0, 0)))

    add_const(w0_aug.astype(cdt))
    add_const(b0.reshape(F, 1).astype(jnp.float32))
    for (w, bvec, _dil) in layers[1:]:
        Cout, Cin_i, Kw = w.shape
        # (Cout, Cin, K) -> (Cout, K*Cin): column index = k*Cin + c, matching
        # the tap concatenation order in the kernel.
        w2 = jnp.transpose(w, (0, 2, 1)).reshape(Cout, Kw * Cin_i)
        add_const(w2.astype(cdt))
        add_const(bvec.reshape(Cout, 1).astype(jnp.float32))
    add_const(br.reshape(F, 1).astype(jnp.float32))

    scratch_shapes = [pltpu.VMEM((Cin_pad, W + 2 * pad0), cdt)]
    if depth > 1:
        scratch_shapes.append(pltpu.VMEM((F, W + 2 * p_act), cdt))

    # ---- cost / VMEM bookkeeping -------------------------------------------
    rows = N * H
    flops = rows * W * (2 * (2 * F) * (K * Cin_pad)
                        + (depth - 1) * 2 * F * (K * F))
    wt_bytes = sum(int(a.size) * a.dtype.itemsize for a in inputs[1:])
    bytes_accessed = int(x_nchw.size * cdt.itemsize + N * F * H * W * 4 + wt_bytes)
    cost = pl.CostEstimate(flops=int(flops), transcendentals=0,
                           bytes_accessed=bytes_accessed)

    blk_bytes = 2 * tbh * W * (Cin * cdt.itemsize + F * 4)     # double-buffered
    scr_bytes = (Cin_pad * (W + 2 * pad0) * cdt.itemsize
                 + (F * (W + 2 * p_act) * cdt.itemsize if depth > 1 else 0))
    est = blk_bytes + 2 * wt_bytes + scr_bytes
    vmem_limit = int(min(48 * 2**20, max(16 * 2**20, 4 * est)))  # v7x-safe cap

    kernel = functools.partial(_fused_kernel, depth=depth, K=K, dils=dils, W=W,
                               pad0=pad0, p_act=p_act, Cin=Cin, F=F, TBH=tbh)

    return pl.pallas_call(
        kernel,
        out_shape=jax.ShapeDtypeStruct((N, F, H, W), jnp.float32),
        grid_spec=pltpu.PrefetchScalarGridSpec(
            num_scalar_prefetch=0,
            grid=(N, H // tbh),
            in_specs=in_specs,
            out_specs=pl.BlockSpec((None, F, tbh, W),
                                   lambda n, h: (n, 0, h, 0)),
            scratch_shapes=scratch_shapes),
        compiler_params=pltpu.CompilerParams(
            dimension_semantics=("parallel", "parallel"),
            vmem_limit_bytes=vmem_limit),
        cost_estimate=cost,
    )(*inputs)


# --------------------------- pure-JAX reference ------------------------------


def reference_forward(x_nchw, params):
    h = x_nchw
    for (w, b, dil) in params["layers"]:
        K = w.shape[-1]
        pad = dil * (K - 1) // 2
        w_oihw = w[:, :, None, :]                        # (Cout, Cin, 1, K)
        h = jax.lax.conv_general_dilated(
            h, w_oihw, window_strides=(1, 1),
            padding=[(0, 0), (pad, pad)], rhs_dilation=(1, dil),
            dimension_numbers=("NCHW", "OIHW", "NCHW"))
        h = h + b[None, :, None, None]
        h = jnp.where(h >= 0, h, NEG_SLOPE * h)
    wr, br = params["residual"]
    wr_oihw = wr[:, :, None, None]                       # (F, Cin, 1, 1)
    res = jax.lax.conv_general_dilated(
        x_nchw, wr_oihw, window_strides=(1, 1), padding=[(0, 0), (0, 0)],
        dimension_numbers=("NCHW", "OIHW", "NCHW")) + br[None, :, None, None]
    return h + res


# ---------------------------------- main --------------------------------------

if __name__ == "__main__":
    key = jax.random.PRNGKey(0)

    # Small shapes consistent with the module (TIDNet temporal filter).
    N, n_chans, H, W = 2, 2, 4, 16
    filters, depth, temp_len = 8, 2, 4
    temp_len = temp_len + 1 - temp_len % 2   # force odd -> 5 (as in __init__)

    keys = jax.random.split(key, 2 * depth + 3)
    layers = []
    cin = n_chans
    for i in range(depth):
        dil = depth - i
        w = 0.1 * jax.random.normal(keys[2 * i], (filters, cin, temp_len),
                                    dtype=jnp.float32)
        b = 0.1 * jax.random.normal(keys[2 * i + 1], (filters,),
                                    dtype=jnp.float32)
        layers.append((w, b, dil))
        cin = filters
    wr = 0.1 * jax.random.normal(keys[-3], (filters, n_chans), dtype=jnp.float32)
    br = 0.1 * jax.random.normal(keys[-2], (filters,), dtype=jnp.float32)
    params = {"layers": layers, "residual": (wr, br)}

    x = jax.random.normal(keys[-1], (N, n_chans, H, W), dtype=jnp.float32)

    ref = reference_forward(x, params)

    # Strict correctness check: f32 matmul operands.
    out_f32 = jax.block_until_ready(
        temporal_filter_forward(x, params, compute_dtype=jnp.float32))
    assert out_f32.shape == (N, filters, H, W), out_f32.shape
    err32 = float(jnp.max(jnp.abs(out_f32 - ref)))
    assert jnp.allclose(out_f32, ref, atol=1e-4, rtol=1e-4), err32

    # bf16 matmul-operand path (review optimization), looser tolerance.
    out_bf16 = jax.block_until_ready(
        temporal_filter_forward(x, params, compute_dtype=jnp.bfloat16))
    assert out_bf16.shape == (N, filters, H, W), out_bf16.shape
    errbf = float(jnp.max(jnp.abs(out_bf16 - ref)))
    assert jnp.allclose(out_bf16, ref, atol=5e-2, rtol=5e-2), errbf

    print("KERNEL_OK")
</pallas_src>

<mosaic_0001>
module attributes {stable_mosaic.version = 11 : i64} {
  func.func @_fused_kernel(%arg0: i32, %arg1: i32, %arg2: memref<1x2x4x16xf32, #tpu.memory_space<vmem>>, %arg3: memref<16x40xf32, #tpu.memory_space<vmem>>, %arg4: memref<8x1xf32, #tpu.memory_space<vmem>>, %arg5: memref<8x40xf32, #tpu.memory_space<vmem>>, %arg6: memref<8x1xf32, #tpu.memory_space<vmem>>, %arg7: memref<8x1xf32, #tpu.memory_space<vmem>>, %arg8: memref<1x8x4x16xf32, #tpu.memory_space<vmem>>, %arg9: memref<8x24xf32, #tpu.memory_space<vmem>>, %arg10: memref<8x20xf32, #tpu.memory_space<vmem>>) attributes {dimension_semantics = [#tpu.dimension_semantics<parallel>, #tpu.dimension_semantics<parallel>], iteration_bounds = array<i64: 2, 1>, scalar_prefetch = 0 : i64, scratch_operands = 2 : i64, tpu.core_type = #tpu.core_type<tc>, window_params = [{transform_indices = @transform_0, window_bounds = array<i64: 1, 2, 4, 16>}, {pipeline_mode = #tpu.pipeline_mode<synchronous>, transform_indices = @transform_1, window_bounds = array<i64: 16, 40>}, {pipeline_mode = #tpu.pipeline_mode<synchronous>, transform_indices = @transform_2, window_bounds = array<i64: 8, 1>}, {pipeline_mode = #tpu.pipeline_mode<synchronous>, transform_indices = @transform_3, window_bounds = array<i64: 8, 40>}, {pipeline_mode = #tpu.pipeline_mode<synchronous>, transform_indices = @transform_4, window_bounds = array<i64: 8, 1>}, {pipeline_mode = #tpu.pipeline_mode<synchronous>, transform_indices = @transform_5, window_bounds = array<i64: 8, 1>}, {transform_indices = @transform_6, window_bounds = array<i64: 1, 8, 4, 16>}]} {
    %cst = arith.constant 0.000000e+00 : f32
    %0 = vector.broadcast %cst : f32 to vector<8x24xf32>
    %c0 = arith.constant 0 : index
    %c0_0 = arith.constant 0 : index
    %1 = vector.load %arg9[%c0, %c0_0] : memref<8x24xf32, #tpu.memory_space<vmem>>, vector<8x24xf32>
    tpu.vector_store %arg9[%c0, %c0_0], %0 {strides = array<i32>} : memref<8x24xf32, #tpu.memory_space<vmem>>, vector<8x24xf32>,
    %cst_1 = arith.constant 0.000000e+00 : f32
    %2 = vector.broadcast %cst_1 : f32 to vector<8x2xf32>
    %c0_2 = arith.constant 0 : index
    %c0_3 = arith.constant 0 : index
    %3 = vector.load %arg10[%c0_2, %c0_3] : memref<8x20xf32, #tpu.memory_space<vmem>>, vector<8x2xf32>
    tpu.vector_store %arg10[%c0_2, %c0_3], %2 {strides = array<i32>} : memref<8x20xf32, #tpu.memory_space<vmem>>, vector<8x2xf32>,
    %c0_4 = arith.constant 0 : index
    %c18 = arith.constant 18 : index
    %4 = vector.load %arg10[%c0_4, %c18] : memref<8x20xf32, #tpu.memory_space<vmem>>, vector<8x2xf32>
    tpu.vector_store %arg10[%c0_4, %c18], %2 {strides = array<i32>} : memref<8x20xf32, #tpu.memory_space<vmem>>, vector<8x2xf32>,
    %c0_5 = arith.constant 0 : index
    %c0_6 = arith.constant 0 : index
    %5 = vector.load %arg3[%c0_5, %c0_6] : memref<16x40xf32, #tpu.memory_space<vmem>>, vector<16x40xf32>
    %c0_7 = arith.constant 0 : index
    %c0_8 = arith.constant 0 : index
    %6 = vector.load %arg5[%c0_7, %c0_8] : memref<8x40xf32, #tpu.memory_space<vmem>>, vector<8x40xf32>
    %c0_9 = arith.constant 0 : index
    %c0_10 = arith.constant 0 : index
    %7 = vector.load %arg4[%c0_9, %c0_10] : memref<8x1xf32, #tpu.memory_space<vmem>>, vector<8x1xf32>
    %c0_11 = arith.constant 0 : index
    %c0_12 = arith.constant 0 : index
    %8 = vector.load %arg6[%c0_11, %c0_12] : memref<8x1xf32, #tpu.memory_space<vmem>>, vector<8x1xf32>
    %c0_13 = arith.constant 0 : index
    %c0_14 = arith.constant 0 : index
    %9 = vector.load %arg7[%c0_13, %c0_14] : memref<8x1xf32, #tpu.memory_space<vmem>>, vector<8x1xf32>
    %c0_15 = arith.constant 0 : index
    %c0_16 = arith.constant 0 : index
    %c0_17 = arith.constant 0 : index
    %c0_18 = arith.constant 0 : index
    %10 = vector.load %arg2[%c0_15, %c0_16, %c0_17, %c0_18] : memref<1x2x4x16xf32, #tpu.memory_space<vmem>>, vector<1x2x1x16xf32>
    %11 = vector.shape_cast %10 : vector<1x2x1x16xf32> to vector<2x16xf32>
    %c0_19 = arith.constant 0 : index
    %c4 = arith.constant 4 : index
    %12 = vector.load %arg9[%c0_19, %c4] : memref<8x24xf32, #tpu.memory_space<vmem>>, vector<2x16xf32>
    tpu.vector_store %arg9[%c0_19, %c4], %11 {strides = array<i32>} : memref<8x24xf32, #tpu.memory_space<vmem>>, vector<2x16xf32>,
    %c0_20 = arith.constant 0 : index
    %c0_21 = arith.constant 0 : index
    %13 = vector.load %arg9[%c0_20, %c0_21] : memref<8x24xf32, #tpu.memory_space<vmem>>, vector<8x16xf32>
    %c0_22 = arith.constant 0 : index
    %c2 = arith.constant 2 : index
    %14 = vector.load %arg9[%c0_22, %c2] : memref<8x24xf32, #tpu.memory_space<vmem>>, vector<8x16xf32>
    %c0_23 = arith.constant 0 : index
    %c4_24 = arith.constant 4 : index
    %15 = vector.load %arg9[%c0_23, %c4_24] : memref<8x24xf32, #tpu.memory_space<vmem>>, vector<8x16xf32>
    %c0_25 = arith.constant 0 : index
    %c6 = arith.constant 6 : index
    %16 = vector.load %arg9[%c0_25, %c6] : memref<8x24xf32, #tpu.memory_space<vmem>>, vector<8x16xf32>
    %c0_26 = arith.constant 0 : index
    %c8 = arith.constant 8 : index
    %17 = vector.load %arg9[%c0_26, %c8] : memref<8x24xf32, #tpu.memory_space<vmem>>, vector<8x16xf32>
    %18 = tpu.concatenate %13, %14, %15, %16, %17 in 0 : vector<8x16xf32>, vector<8x16xf32>, vector<8x16xf32>, vector<8x16xf32>, vector<8x16xf32> -> vector<40x16xf32>
    %cst_27 = arith.constant dense<0.000000e+00> : vector<16x16xf32>
    %19 = tpu.matmul %5, %18, %cst_27 {dimension_numbers = #tpu.dot_dimension_numbers<[1], [0], [0], [1], [0, 0, 1, 1], [], []>} : vector<16x40xf32>, vector<40x16xf32>, vector<16x16xf32> -> vector<16x16xf32>
    %20 = vector.extract_strided_slice %19 {offsets = [0, 0], sizes = [8, 16], strides = [1, 1]} : vector<16x16xf32> to vector<8x16xf32>
    %21 = vector.broadcast %7 : vector<8x1xf32> to vector<8x16xf32>
    %22 = arith.addf %20, %21 : vector<8x16xf32>
    %cst_28 = arith.constant 0.000000e+00 : f32
    %23 = vector.broadcast %cst_28 : f32 to vector<8x16xf32>
    %24 = arith.cmpf oge, %22, %23 : vector<8x16xf32>
    %cst_29 = arith.constant 0.00999999977 : f32
    %25 = vector.broadcast %cst_29 : f32 to vector<8x16xf32>
    %26 = arith.mulf %25, %22 : vector<8x16xf32>
    %27 = arith.select %24, %22, %26 : vector<8x16xi1>, vector<8x16xf32>
    %28 = vector.extract_strided_slice %19 {offsets = [8, 0], sizes = [8, 16], strides = [1, 1]} : vector<16x16xf32> to vector<8x16xf32>
    %c0_30 = arith.constant 0 : index
    %c2_31 = arith.constant 2 : index
    %29 = vector.load %arg10[%c0_30, %c2_31] : memref<8x20xf32, #tpu.memory_space<vmem>>, vector<8x16xf32>
    tpu.vector_store %arg10[%c0_30, %c2_31], %27 {strides = array<i32>} : memref<8x20xf32, #tpu.memory_space<vmem>>, vector<8x16xf32>,
    %c0_32 = arith.constant 0 : index
    %c0_33 = arith.constant 0 : index
    %30 = vector.load %arg10[%c0_32, %c0_33] : memref<8x20xf32, #tpu.memory_space<vmem>>, vector<8x16xf32>
    %c0_34 = arith.constant 0 : index
    %c1 = arith.constant 1 : index
    %31 = vector.load %arg10[%c0_34, %c1] : memref<8x20xf32, #tpu.memory_space<vmem>>, vector<8x16xf32>
    %c0_35 = arith.constant 0 : index
    %c2_36 = arith.constant 2 : index
    %32 = vector.load %arg10[%c0_35, %c2_36] : memref<8x20xf32, #tpu.memory_space<vmem>>, vector<8x16xf32>
    %c0_37 = arith.constant 0 : index
    %c3 = arith.constant 3 : index
    %33 = vector.load %arg10[%c0_37, %c3] : memref<8x20xf32, #tpu.memory_space<vmem>>, vector<8x16xf32>
    %c0_38 = arith.constant 0 : index
    %c4_39 = arith.constant 4 : index
    %34 = vector.load %arg10[%c0_38, %c4_39] : memref<8x20xf32, #tpu.memory_space<vmem>>, vector<8x16xf32>
    %35 = tpu.concatenate %30, %31, %32, %33, %34 in 0 : vector<8x16xf32>, vector<8x16xf32>, vector<8x16xf32>, vector<8x16xf32>, vector<8x16xf32> -> vector<40x16xf32>
    %cst_40 = arith.constant dense<0.000000e+00> : vector<8x16xf32>
    %36 = tpu.matmul %6, %35, %cst_40 {dimension_numbers = #tpu.dot_dimension_numbers<[1], [0], [0], [1], [0, 0, 1, 1], [], []>} : vector<8x40xf32>, vector<40x16xf32>, vector<8x16xf32> -> vector<8x16xf32>
    %37 = vector.broadcast %8 : vector<8x1xf32> to vector<8x16xf32>
    %38 = arith.addf %36, %37 : vector<8x16xf32>
    %cst_41 = arith.constant 0.000000e+00 : f32
    %39 = vector.broadcast %cst_41 : f32 to vector<8x16xf32>
    %40 = arith.cmpf oge, %38, %39 : vector<8x16xf32>
    %cst_42 = arith.constant 0.00999999977 : f32
    %41 = vector.broadcast %cst_42 : f32 to vector<8x16xf32>
    %42 = arith.mulf %41, %38 : vector<8x16xf32>
    %43 = arith.select %40, %38, %42 : vector<8x16xi1>, vector<8x16xf32>
    %44 = arith.addf %43, %28 : vector<8x16xf32>
    %45 = vector.broadcast %9 : vector<8x1xf32> to vector<8x16xf32>
    %46 = arith.addf %44, %45 : vector<8x16xf32>
    %c0_43 = arith.constant 0 : index
    %c0_44 = arith.constant 0 : index
    %c0_45 = arith.constant 0 : index
    %c0_46 = arith.constant 0 : index
    %47 = vector.load %arg8[%c0_43, %c0_44, %c0_45, %c0_46] : memref<1x8x4x16xf32, #tpu.memory_space<vmem>>, vector<1x8x1x16xf32>
    %48 = vector.shape_cast %47 : vector<1x8x1x16xf32> to vector<8x16xf32>
    %49 = vector.shape_cast %46 : vector<8x16xf32> to vector<1x8x1x16xf32>
    tpu.vector_store %arg8[%c0_43, %c0_44, %c0_45, %c0_46], %49 {strides = array<i32>} : memref<1x8x4x16xf32, #tpu.memory_space<vmem>>, vector<1x8x1x16xf32>,
    %c0_47 = arith.constant 0 : index
    %c0_48 = arith.constant 0 : index
    %c1_49 = arith.constant 1 : index
    %c0_50 = arith.constant 0 : index
    %50 = vector.load %arg2[%c0_47, %c0_48, %c1_49, %c0_50] : memref<1x2x4x16xf32, #tpu.memory_space<vmem>>, vector<1x2x1x16xf32>
    %51 = vector.shape_cast %50 : vector<1x2x1x16xf32> to vector<2x16xf32>
    %c0_51 = arith.constant 0 : index
    %c4_52 = arith.constant 4 : index
    %52 = vector.load %arg9[%c0_51, %c4_52] : memref<8x24xf32, #tpu.memory_space<vmem>>, vector<2x16xf32>
    tpu.vector_store %arg9[%c0_51, %c4_52], %51 {strides = array<i32>} : memref<8x24xf32, #tpu.memory_space<vmem>>, vector<2x16xf32>,
    %c0_53 = arith.constant 0 : index
    %c0_54 = arith.constant 0 : index
    %53 = vector.load %arg9[%c0_53, %c0_54] : memref<8x24xf32, #tpu.memory_space<vmem>>, vector<8x16xf32>
    %c0_55 = arith.constant 0 : index
    %c2_56 = arith.constant 2 : index
    %54 = vector.load %arg9[%c0_55, %c2_56] : memref<8x24xf32, #tpu.memory_space<vmem>>, vector<8x16xf32>
    %c0_57 = arith.constant 0 : index
    %c4_58 = arith.constant 4 : index
    %55 = vector.load %arg9[%c0_57, %c4_58] : memref<8x24xf32, #tpu.memory_space<vmem>>, vector<8x16xf32>
    %c0_59 = arith.constant 0 : index
    %c6_60 = arith.constant 6 : index
    %56 = vector.load %arg9[%c0_59, %c6_60] : memref<8x24xf32, #tpu.memory_space<vmem>>, vector<8x16xf32>
    %c0_61 = arith.constant 0 : index
    %c8_62 = arith.constant 8 : index
    %57 = vector.load %arg9[%c0_61, %c8_62] : memref<8x24xf32, #tpu.memory_space<vmem>>, vector<8x16xf32>
    %58 = tpu.concatenate %53, %54, %55, %56, %57 in 0 : vector<8x16xf32>, vector<8x16xf32>, vector<8x16xf32>, vector<8x16xf32>, vector<8x16xf32> -> vector<40x16xf32>
    %cst_63 = arith.constant dense<0.000000e+00> : vector<16x16xf32>
    %59 = tpu.matmul %5, %58, %cst_63 {dimension_numbers = #tpu.dot_dimension_numbers<[1], [0], [0], [1], [0, 0, 1, 1], [], []>} : vector<16x40xf32>, vector<40x16xf32>, vector<16x16xf32> -> vector<16x16xf32>
    %60 = vector.extract_strided_slice %59 {offsets = [0, 0], sizes = [8, 16], strides = [1, 1]} : vector<16x16xf32> to vector<8x16xf32>
    %61 = vector.broadcast %7 : vector<8x1xf32> to vector<8x16xf32>
    %62 = arith.addf %60, %61 : vector<8x16xf32>
    %cst_64 = arith.constant 0.000000e+00 : f32
    %63 = vector.broadcast %cst_64 : f32 to vector<8x16xf32>
    %64 = arith.cmpf oge, %62, %63 : vector<8x16xf32>
    %cst_65 = arith.constant 0.00999999977 : f32
    %65 = vector.broadcast %cst_65 : f32 to vector<8x16xf32>
    %66 = arith.mulf %65, %62 : vector<8x16xf32>
    %67 = arith.select %64, %62, %66 : vector<8x16xi1>, vector<8x16xf32>
    %68 = vector.extract_strided_slice %59 {offsets = [8, 0], sizes = [8, 16], strides = [1, 1]} : vector<16x16xf32> to vector<8x16xf32>
    %c0_66 = arith.constant 0 : index
    %c2_67 = arith.constant 2 : index
    %69 = vector.load %arg10[%c0_66, %c2_67] : memref<8x20xf32, #tpu.memory_space<vmem>>, vector<8x16xf32>
    tpu.vector_store %arg10[%c0_66, %c2_67], %67 {strides = array<i32>} : memref<8x20xf32, #tpu.memory_space<vmem>>, vector<8x16xf32>,
    %c0_68 = arith.constant 0 : index
    %c0_69 = arith.constant 0 : index
    %70 = vector.load %arg10[%c0_68, %c0_69] : memref<8x20xf32, #tpu.memory_space<vmem>>, vector<8x16xf32>
    %c0_70 = arith.constant 0 : index
    %c1_71 = arith.constant 1 : index
    %71 = vector.load %arg10[%c0_70, %c1_71] : memref<8x20xf32, #tpu.memory_space<vmem>>, vector<8x16xf32>
    %c0_72 = arith.constant 0 : index
    %c2_73 = arith.constant 2 : index
    %72 = vector.load %arg10[%c0_72, %c2_73] : memref<8x20xf32, #tpu.memory_space<vmem>>, vector<8x16xf32>
    %c0_74 = arith.constant 0 : index
    %c3_75 = arith.constant 3 : index
    %73 = vector.load %arg10[%c0_74, %c3_75] : memref<8x20xf32, #tpu.memory_space<vmem>>, vector<8x16xf32>
    %c0_76 = arith.constant 0 : index
    %c4_77 = arith.constant 4 : index
    %74 = vector.load %arg10[%c0_76, %c4_77] : memref<8x20xf32, #tpu.memory_space<vmem>>, vector<8x16xf32>
    %75 = tpu.concatenate %70, %71, %72, %73, %74 in 0 : vector<8x16xf32>, vector<8x16xf32>, vector<8x16xf32>, vector<8x16xf32>, vector<8x16xf32> -> vector<40x16xf32>
    %cst_78 = arith.constant dense<0.000000e+00> : vector<8x16xf32>
    %76 = tpu.matmul %6, %75, %cst_78 {dimension_numbers = #tpu.dot_dimension_numbers<[1], [0], [0], [1], [0, 0, 1, 1], [], []>} : vector<8x40xf32>, vector<40x16xf32>, vector<8x16xf32> -> vector<8x16xf32>
    %77 = vector.broadcast %8 : vector<8x1xf32> to vector<8x16xf32>
    %78 = arith.addf %76, %77 : vector<8x16xf32>
    %cst_79 = arith.constant 0.000000e+00 : f32
    %79 = vector.broadcast %cst_79 : f32 to vector<8x16xf32>
    %80 = arith.cmpf oge, %78, %79 : vector<8x16xf32>
    %cst_80 = arith.constant 0.00999999977 : f32
    %81 = vector.broadcast %cst_80 : f32 to vector<8x16xf32>
    %82 = arith.mulf %81, %78 : vector<8x16xf32>
    %83 = arith.select %80, %78, %82 : vector<8x16xi1>, vector<8x16xf32>
    %84 = arith.addf %83, %68 : vector<8x16xf32>
    %85 = vector.broadcast %9 : vector<8x1xf32> to vector<8x16xf32>
    %86 = arith.addf %84, %85 : vector<8x16xf32>
    %c0_81 = arith.constant 0 : index
    %c0_82 = arith.constant 0 : index
    %c1_83 = arith.constant 1 : index
    %c0_84 = arith.constant 0 : index
    %87 = vector.load %arg8[%c0_81, %c0_82, %c1_83, %c0_84] : memref<1x8x4x16xf32, #tpu.memory_space<vmem>>, vector<1x8x1x16xf32>
    %88 = vector.shape_cast %87 : vector<1x8x1x16xf32> to vector<8x16xf32>
    %89 = vector.shape_cast %86 : vector<8x16xf32> to vector<1x8x1x16xf32>
    tpu.vector_store %arg8[%c0_81, %c0_82, %c1_83, %c0_84], %89 {strides = array<i32>} : memref<1x8x4x16xf32, #tpu.memory_space<vmem>>, vector<1x8x1x16xf32>,
    %c0_85 = arith.constant 0 : index
    %c0_86 = arith.constant 0 : index
    %c2_87 = arith.constant 2 : index
    %c0_88 = arith.constant 0 : index
    %90 = vector.load %arg2[%c0_85, %c0_86, %c2_87, %c0_88] : memref<1x2x4x16xf32, #tpu.memory_space<vmem>>, vector<1x2x1x16xf32>
    %91 = vector.shape_cast %90 : vector<1x2x1x16xf32> to vector<2x16xf32>
    %c0_89 = arith.constant 0 : index
    %c4_90 = arith.constant 4 : index
    %92 = vector.load %arg9[%c0_89, %c4_90] : memref<8x24xf32, #tpu.memory_space<vmem>>, vector<2x16xf32>
    tpu.vector_store %arg9[%c0_89, %c4_90], %91 {strides = array<i32>} : memref<8x24xf32, #tpu.memory_space<vmem>>, vector<2x16xf32>,
    %c0_91 = arith.constant 0 : index
    %c0_92 = arith.constant 0 : index
    %93 = vector.load %arg9[%c0_91, %c0_92] : memref<8x24xf32, #tpu.memory_space<vmem>>, vector<8x16xf32>
    %c0_93 = arith.constant 0 : index
    %c2_94 = arith.constant 2 : index
    %94 = vector.load %arg9[%c0_93, %c2_94] : memref<8x24xf32, #tpu.memory_space<vmem>>, vector<8x16xf32>
    %c0_95 = arith.constant 0 : index
    %c4_96 = arith.constant 4 : index
    %95 = vector.load %arg9[%c0_95, %c4_96] : memref<8x24xf32, #tpu.memory_space<vmem>>, vector<8x16xf32>
    %c0_97 = arith.constant 0 : index
    %c6_98 = arith.constant 6 : index
    %96 = vector.load %arg9[%c0_97, %c6_98] : memref<8x24xf32, #tpu.memory_space<vmem>>, vector<8x16xf32>
    %c0_99 = arith.constant 0 : index
    %c8_100 = arith.constant 8 : index
    %97 = vector.load %arg9[%c0_99, %c8_100] : memref<8x24xf32, #tpu.memory_space<vmem>>, vector<8x16xf32>
    %98 = tpu.concatenate %93, %94, %95, %96, %97 in 0 : vector<8x16xf32>, vector<8x16xf32>, vector<8x16xf32>, vector<8x16xf32>, vector<8x16xf32> -> vector<40x16xf32>
    %cst_101 = arith.constant dense<0.000000e+00> : vector<16x16xf32>
    %99 = tpu.matmul %5, %98, %cst_101 {dimension_numbers = #tpu.dot_dimension_numbers<[1], [0], [0], [1], [0, 0, 1, 1], [], []>} : vector<16x40xf32>, vector<40x16xf32>, vector<16x16xf32> -> vector<16x16xf32>
    %100 = vector.extract_strided_slice %99 {offsets = [0, 0], sizes = [8, 16], strides = [1, 1]} : vector<16x16xf32> to vector<8x16xf32>
    %101 = vector.broadcast %7 : vector<8x1xf32> to vector<8x16xf32>
    %102 = arith.addf %100, %101 : vector<8x16xf32>
    %cst_102 = arith.constant 0.000000e+00 : f32
    %103 = vector.broadcast %cst_102 : f32 to vector<8x16xf32>
    %104 = arith.cmpf oge, %102, %103 : vector<8x16xf32>
    %cst_103 = arith.constant 0.00999999977 : f32
    %105 = vector.broadcast %cst_103 : f32 to vector<8x16xf32>
    %106 = arith.mulf %105, %102 : vector<8x16xf32>
    %107 = arith.select %104, %102, %106 : vector<8x16xi1>, vector<8x16xf32>
    %108 = vector.extract_strided_slice %99 {offsets = [8, 0], sizes = [8, 16], strides = [1, 1]} : vector<16x16xf32> to vector<8x16xf32>
    %c0_104 = arith.constant 0 : index
    %c2_105 = arith.constant 2 : index
    %109 = vector.load %arg10[%c0_104, %c2_105] : memref<8x20xf32, #tpu.memory_space<vmem>>, vector<8x16xf32>
    tpu.vector_store %arg10[%c0_104, %c2_105], %107 {strides = array<i32>} : memref<8x20xf32, #tpu.memory_space<vmem>>, vector<8x16xf32>,
    %c0_106 = arith.constant 0 : index
    %c0_107 = arith.constant 0 : index
    %110 = vector.load %arg10[%c0_106, %c0_107] : memref<8x20xf32, #tpu.memory_space<vmem>>, vector<8x16xf32>
    %c0_108 = arith.constant 0 : index
    %c1_109 = arith.constant 1 : index
    %111 = vector.load %arg10[%c0_108, %c1_109] : memref<8x20xf32, #tpu.memory_space<vmem>>, vector<8x16xf32>
    %c0_110 = arith.constant 0 : index
    %c2_111 = arith.constant 2 : index
    %112 = vector.load %arg10[%c0_110, %c2_111] : memref<8x20xf32, #tpu.memory_space<vmem>>, vector<8x16xf32>
    %c0_112 = arith.constant 0 : index
    %c3_113 = arith.constant 3 : index
    %113 = vector.load %arg10[%c0_112, %c3_113] : memref<8x20xf32, #tpu.memory_space<vmem>>, vector<8x16xf32>
    %c0_114 = arith.constant 0 : index
    %c4_115 = arith.constant 4 : index
    %114 = vector.load %arg10[%c0_114, %c4_115] : memref<8x20xf32, #tpu.memory_space<vmem>>, vector<8x16xf32>
    %115 = tpu.concatenate %110, %111, %112, %113, %114 in 0 : vector<8x16xf32>, vector<8x16xf32>, vector<8x16xf32>, vector<8x16xf32>, vector<8x16xf32> -> vector<40x16xf32>
    %cst_116 = arith.constant dense<0.000000e+00> : vector<8x16xf32>
    %116 = tpu.matmul %6, %115, %cst_116 {dimension_numbers = #tpu.dot_dimension_numbers<[1], [0], [0], [1], [0, 0, 1, 1], [], []>} : vector<8x40xf32>, vector<40x16xf32>, vector<8x16xf32> -> vector<8x16xf32>
    %117 = vector.broadcast %8 : vector<8x1xf32> to vector<8x16xf32>
    %118 = arith.addf %116, %117 : vector<8x16xf32>
    %cst_117 = arith.constant 0.000000e+00 : f32
    %119 = vector.broadcast %cst_117 : f32 to vector<8x16xf32>
    %120 = arith.cmpf oge, %118, %119 : vector<8x16xf32>
    %cst_118 = arith.constant 0.00999999977 : f32
    %121 = vector.broadcast %cst_118 : f32 to vector<8x16xf32>
    %122 = arith.mulf %121, %118 : vector<8x16xf32>
    %123 = arith.select %120, %118, %122 : vector<8x16xi1>, vector<8x16xf32>
    %124 = arith.addf %123, %108 : vector<8x16xf32>
    %125 = vector.broadcast %9 : vector<8x1xf32> to vector<8x16xf32>
    %126 = arith.addf %124, %125 : vector<8x16xf32>
    %c0_119 = arith.constant 0 : index
    %c0_120 = arith.constant 0 : index
    %c2_121 = arith.constant 2 : index
    %c0_122 = arith.constant 0 : index
    %127 = vector.load %arg8[%c0_119, %c0_120, %c2_121, %c0_122] : memref<1x8x4x16xf32, #tpu.memory_space<vmem>>, vector<1x8x1x16xf32>
    %128 = vector.shape_cast %127 : vector<1x8x1x16xf32> to vector<8x16xf32>
    %129 = vector.shape_cast %126 : vector<8x16xf32> to vector<1x8x1x16xf32>
    tpu.vector_store %arg8[%c0_119, %c0_120, %c2_121, %c0_122], %129 {strides = array<i32>} : memref<1x8x4x16xf32, #tpu.memory_space<vmem>>, vector<1x8x1x16xf32>,
    %c0_123 = arith.constant 0 : index
    %c0_124 = arith.constant 0 : index
    %c3_125 = arith.constant 3 : index
    %c0_126 = arith.constant 0 : index
    %130 = vector.load %arg2[%c0_123, %c0_124, %c3_125, %c0_126] : memref<1x2x4x16xf32, #tpu.memory_space<vmem>>, vector<1x2x1x16xf32>
    %131 = vector.shape_cast %130 : vector<1x2x1x16xf32> to vector<2x16xf32>
    %c0_127 = arith.constant 0 : index
    %c4_128 = arith.constant 4 : index
    %132 = vector.load %arg9[%c0_127, %c4_128] : memref<8x24xf32, #tpu.memory_space<vmem>>, vector<2x16xf32>
    tpu.vector_store %arg9[%c0_127, %c4_128], %131 {strides = array<i32>} : memref<8x24xf32, #tpu.memory_space<vmem>>, vector<2x16xf32>,
    %c0_129 = arith.constant 0 : index
    %c0_130 = arith.constant 0 : index
    %133 = vector.load %arg9[%c0_129, %c0_130] : memref<8x24xf32, #tpu.memory_space<vmem>>, vector<8x16xf32>
    %c0_131 = arith.constant 0 : index
    %c2_132 = arith.constant 2 : index
    %134 = vector.load %arg9[%c0_131, %c2_132] : memref<8x24xf32, #tpu.memory_space<vmem>>, vector<8x16xf32>
    %c0_133 = arith.constant 0 : index
    %c4_134 = arith.constant 4 : index
    %135 = vector.load %arg9[%c0_133, %c4_134] : memref<8x24xf32, #tpu.memory_space<vmem>>, vector<8x16xf32>
    %c0_135 = arith.constant 0 : index
    %c6_136 = arith.constant 6 : index
    %136 = vector.load %arg9[%c0_135, %c6_136] : memref<8x24xf32, #tpu.memory_space<vmem>>, vector<8x16xf32>
    %c0_137 = arith.constant 0 : index
    %c8_138 = arith.constant 8 : index
    %137 = vector.load %arg9[%c0_137, %c8_138] : memref<8x24xf32, #tpu.memory_space<vmem>>, vector<8x16xf32>
    %138 = tpu.concatenate %133, %134, %135, %136, %137 in 0 : vector<8x16xf32>, vector<8x16xf32>, vector<8x16xf32>, vector<8x16xf32>, vector<8x16xf32> -> vector<40x16xf32>
    %cst_139 = arith.constant dense<0.000000e+00> : vector<16x16xf32>
    %139 = tpu.matmul %5, %138, %cst_139 {dimension_numbers = #tpu.dot_dimension_numbers<[1], [0], [0], [1], [0, 0, 1, 1], [], []>} : vector<16x40xf32>, vector<40x16xf32>, vector<16x16xf32> -> vector<16x16xf32>
    %140 = vector.extract_strided_slice %139 {offsets = [0, 0], sizes = [8, 16], strides = [1, 1]} : vector<16x16xf32> to vector<8x16xf32>
    %141 = vector.broadcast %7 : vector<8x1xf32> to vector<8x16xf32>
    %142 = arith.addf %140, %141 : vector<8x16xf32>
    %cst_140 = arith.constant 0.000000e+00 : f32
    %143 = vector.broadcast %cst_140 : f32 to vector<8x16xf32>
    %144 = arith.cmpf oge, %142, %143 : vector<8x16xf32>
    %cst_141 = arith.constant 0.00999999977 : f32
    %145 = vector.broadcast %cst_141 : f32 to vector<8x16xf32>
    %146 = arith.mulf %145, %142 : vector<8x16xf32>
    %147 = arith.select %144, %142, %146 : vector<8x16xi1>, vector<8x16xf32>
    %148 = vector.extract_strided_slice %139 {offsets = [8, 0], sizes = [8, 16], strides = [1, 1]} : vector<16x16xf32> to vector<8x16xf32>
    %c0_142 = arith.constant 0 : index
    %c2_143 = arith.constant 2 : index
    %149 = vector.load %arg10[%c0_142, %c2_143] : memref<8x20xf32, #tpu.memory_space<vmem>>, vector<8x16xf32>
    tpu.vector_store %arg10[%c0_142, %c2_143], %147 {strides = array<i32>} : memref<8x20xf32, #tpu.memory_space<vmem>>, vector<8x16xf32>,
    %c0_144 = arith.constant 0 : index
    %c0_145 = arith.constant 0 : index
    %150 = vector.load %arg10[%c0_144, %c0_145] : memref<8x20xf32, #tpu.memory_space<vmem>>, vector<8x16xf32>
    %c0_146 = arith.constant 0 : index
    %c1_147 = arith.constant 1 : index
    %151 = vector.load %arg10[%c0_146, %c1_147] : memref<8x20xf32, #tpu.memory_space<vmem>>, vector<8x16xf32>
    %c0_148 = arith.constant 0 : index
    %c2_149 = arith.constant 2 : index
    %152 = vector.load %arg10[%c0_148, %c2_149] : memref<8x20xf32, #tpu.memory_space<vmem>>, vector<8x16xf32>
    %c0_150 = arith.constant 0 : index
    %c3_151 = arith.constant 3 : index
    %153 = vector.load %arg10[%c0_150, %c3_151] : memref<8x20xf32, #tpu.memory_space<vmem>>, vector<8x16xf32>
    %c0_152 = arith.constant 0 : index
    %c4_153 = arith.constant 4 : index
    %154 = vector.load %arg10[%c0_152, %c4_153] : memref<8x20xf32, #tpu.memory_space<vmem>>, vector<8x16xf32>
    %155 = tpu.concatenate %150, %151, %152, %153, %154 in 0 : vector<8x16xf32>, vector<8x16xf32>, vector<8x16xf32>, vector<8x16xf32>, vector<8x16xf32> -> vector<40x16xf32>
    %cst_154 = arith.constant dense<0.000000e+00> : vector<8x16xf32>
    %156 = tpu.matmul %6, %155, %cst_154 {dimension_numbers = #tpu.dot_dimension_numbers<[1], [0], [0], [1], [0, 0, 1, 1], [], []>} : vector<8x40xf32>, vector<40x16xf32>, vector<8x16xf32> -> vector<8x16xf32>
    %157 = vector.broadcast %8 : vector<8x1xf32> to vector<8x16xf32>
    %158 = arith.addf %156, %157 : vector<8x16xf32>
    %cst_155 = arith.constant 0.000000e+00 : f32
    %159 = vector.broadcast %cst_155 : f32 to vector<8x16xf32>
    %160 = arith.cmpf oge, %158, %159 : vector<8x16xf32>
    %cst_156 = arith.constant 0.00999999977 : f32
    %161 = vector.broadcast %cst_156 : f32 to vector<8x16xf32>
    %162 = arith.mulf %161, %158 : vector<8x16xf32>
    %163 = arith.select %160, %158, %162 : vector<8x16xi1>, vector<8x16xf32>
    %164 = arith.addf %163, %148 : vector<8x16xf32>
    %165 = vector.broadcast %9 : vector<8x1xf32> to vector<8x16xf32>
    %166 = arith.addf %164, %165 : vector<8x16xf32>
    %c0_157 = arith.constant 0 : index
    %c0_158 = arith.constant 0 : index
    %c3_159 = arith.constant 3 : index
    %c0_160 = arith.constant 0 : index
    %167 = vector.load %arg8[%c0_157, %c0_158, %c3_159, %c0_160] : memref<1x8x4x16xf32, #tpu.memory_space<vmem>>, vector<1x8x1x16xf32>
    %168 = vector.shape_cast %167 : vector<1x8x1x16xf32> to vector<8x16xf32>
    %169 = vector.shape_cast %166 : vector<8x16xf32> to vector<1x8x1x16xf32>
    tpu.vector_store %arg8[%c0_157, %c0_158, %c3_159, %c0_160], %169 {strides = array<i32>} : memref<1x8x4x16xf32, #tpu.memory_space<vmem>>, vector<1x8x1x16xf32>,
    return
  }
  func.func @transform_0(%arg0: i32, %arg1: i32) -> (i32, i32, i32, i32) {
    %c0_i32 = arith.constant 0 : i32
    %c0_i32_0 = arith.constant 0 : i32
    %c0_i32_1 = arith.constant 0 : i32
    return %arg0, %c0_i32, %arg1, %c0_i32_0 : i32, i32, i32, i32
  }
  func.func @transform_1(%arg0: i32, %arg1: i32) -> (i32, i32) {
    %c0_i32 = arith.constant 0 : i32
    %c0_i32_0 = arith.constant 0 : i32
    %c0_i32_1 = arith.constant 0 : i32
    return %c0_i32, %c0_i32_0 : i32, i32
  }
  func.func @transform_2(%arg0: i32, %arg1: i32) -> (i32, i32) {
    %c0_i32 = arith.constant 0 : i32
    %c0_i32_0 = arith.constant 0 : i32
    %c0_i32_1 = arith.constant 0 : i32
    return %c0_i32, %c0_i32_0 : i32, i32
  }
  func.func @transform_3(%arg0: i32, %arg1: i32) -> (i32, i32) {
    %c0_i32 = arith.constant 0 : i32
    %c0_i32_0 = arith.constant 0 : i32
    %c0_i32_1 = arith.constant 0 : i32
    return %c0_i32, %c0_i32_0 : i32, i32
  }
  func.func @transform_4(%arg0: i32, %arg1: i32) -> (i32, i32) {
    %c0_i32 = arith.constant 0 : i32
    %c0_i32_0 = arith.constant 0 : i32
    %c0_i32_1 = arith.constant 0 : i32
    return %c0_i32, %c0_i32_0 : i32, i32
  }
  func.func @transform_5(%arg0: i32, %arg1: i32) -> (i32, i32) {
    %c0_i32 = arith.constant 0 : i32
    %c0_i32_0 = arith.constant 0 : i32
    %c0_i32_1 = arith.constant 0 : i32
    return %c0_i32, %c0_i32_0 : i32, i32
  }
  func.func @transform_6(%arg0: i32, %arg1: i32) -> (i32, i32, i32, i32) {
    %c0_i32 = arith.constant 0 : i32
    %c0_i32_0 = arith.constant 0 : i32
    %c0_i32_1 = arith.constant 0 : i32
    return %arg0, %c0_i32, %arg1, %c0_i32_0 : i32, i32, i32, i32
  }
}

</mosaic_0001>

<llo_original>
// kernel: tpu_custom_call.1
$region0: #{tpu_custom_call.1}
  #allocation0 [shape = 'u32[]', space=smem, size = 0x4, offset = 0x4, fixed_abs, tag = 'smem constant byte address 0x4 - core index']
  #allocation1 [shape = 'u32[72,128]{1,0:T(1,128)}', space=vmem, size = 0x9000, scoped, tag = 'internal scratch']
  #allocation2 [shape = 'f32[8,24]{1,0:T(8,128)}', space=vmem, size = 0x1000, scoped, tag = 'scratch operand']
  #allocation3 [shape = 'f32[8,20]{1,0:T(8,128)}', space=vmem, size = 0x1000, scoped, tag = 'scratch operand']
  %s0 = inlined_call_operand.vmem [shape: f32[2,2,4,16], index: 0, kind: input, shape index: {}]
  %s1 = inlined_call_operand.hbm [shape: f32[16,40], index: 1, kind: input, shape index: {}]
  %s2 = inlined_call_operand.vmem [shape: f32[8,1], index: 2, kind: input, shape index: {}]
  %s3 = inlined_call_operand.vmem [shape: f32[8,40], index: 3, kind: input, shape index: {}]
  %s4 = inlined_call_operand.vmem [shape: f32[8,1], index: 4, kind: input, shape index: {}]
  %s5 = inlined_call_operand.vmem [shape: f32[8,1], index: 5, kind: input, shape index: {}]
  %s6 = inlined_call_operand.hbm [shape: f32[2,8,4,16], index: 6, kind: output, shape index: {}]
  %s7 = sld [smem:[#allocation0]]
  $region61: #{tpu_custom_call.1} parent=0
    _
  %s9 = ssub.s32 1, %s7
  %s10 = scalar_select 0, %s9, %s7
  $region1: #{tpu_custom_call.1} parent=0
    #allocation4 [shape = 'u8[8192]{0}', space=vmem, size = 0x2000, scoped, tag = 'input window, operand 1, single buffered']
    #allocation5 [shape = 's32[2]{0}', space=sflag, size = 0x8, scoped, tag = 'scoped memory for tpu_custom_call.1']
    #allocation6 [shape = 's32[2]{0}', space=sflag, size = 0x8, scoped, tag = 'scoped memory for tpu_custom_call.1']
    #allocation7 [shape = 'u8[32768]{0}', space=vmem, size = 0x8000, scoped, tag = 'output window, operand 0']
    %11 = vsyncpa [#allocation5], 0
    %12 = vsyncpa [#allocation6], 0
    %s13 = scalar_lea.sflag [#allocation6], 1
    %14 = vsyncpa %s13, 0
    loop: start=0, step=1, limit=4
    $region2: #{tpu_custom_call.1} parent=1 // loop_pre_header
      _
    $region3: #{tpu_custom_call.1} parent=1 // loop_header
      %s16 = sphi 0, %s20
      %p17 = scmp.ge.s32.totalorder %s16, 4
      %s23 = sphi 0, %s35
      %s24 = sphi 0, %s31
      %s25 = sphi 0, %s23
      %s26 = sphi 0, %s24
      %s27 = sphi 0, %s25
      %s28 = sphi 0, %s26
      %s40 = sphi 0, %s42
      %s43 = sphi 0, %s40
      %s44 = sphi 0, %s43
      %s60 = sphi 0, %s44
      %s64 = sphi 0, %s64
      %s66 = sphi 0, %s64
      %s67 = sphi 0, %s66
      %s81 = sphi 0, %s67
      %s85 = sphi 0, %s85
      %s87 = sphi 0, %s85
      %s88 = sphi 0, %s87
      %s102 = sphi 0, %s88
      %s106 = sphi 0, %s106
      %s108 = sphi 0, %s106
      %s109 = sphi 0, %s108
      %s123 = sphi 0, %s109
      %s127 = sphi 0, %s127
      %s129 = sphi 0, %s127
      %s130 = sphi 0, %s129
      %s144 = sphi 0, %s130
      %s148 = sphi 0, %s148
      %s150 = sphi 0, %s148
      %s151 = sphi 0, %s150
      %s165 = sphi 0, %s151
      %s173 = sphi 0, %s175
      %s176 = sphi 0, %s173
      %s177 = sphi 0, %s176
      %s193 = sphi 0, %s177
    $region4: #{tpu_custom_call.1} parent=1 // loop_header_branch
      %19 = sbr.rel (%p17) target = $region8
    $region5: #{tpu_custom_call.1} parent=1 // loop_body
      %s21 = ssub.s32 %s16, 1
      %s22 = ssub.s32 %s16, 2
      %s29 = sadd.s32 1, %s24
      %p30 = scmp.ge.s32.totalorder %s29, 1
      %s31 = scalar_select %p30, 0, %s29
      %s32 = sadd.s32 1, %s23
      %s33 = scalar_select %p30, %s32, %s23
      %p34 = scmp.ge.s32.totalorder %s33, 2
      %s35 = scalar_select %p34, 0, %s33
      %s36 = ssub.s32 %s23, %s35
      %s37 = ssub.s32 %s24, %s31
      %s38 = sor.u32 %s36, %s37
      %p39 = scmp.eq.s32.totalorder %s38, 0
      %s41 = sadd.s32 %s40, 1
      %s42 = scalar_select %p39, %s40, %s41
      %p45 = pneg %p39
      %p46 = scmp.eq.s32.totalorder %s16, 1
      %p47 = por %p45, %p46
      %p48 = scmp.ne.s32.totalorder %s40, %s43
      %p49 = scmp.eq.s32.totalorder %s16, 0
      %p50 = por %p48, %p49
      %p51 = scmp.ne.s32.totalorder %s40, %s43
      %p52 = scmp.eq.s32.totalorder %s21, 1
      %p53 = por %p51, %p52
      %p54 = scmp.ne.s32.totalorder %s43, %s44
      %p55 = scmp.eq.s32.totalorder %s21, 0
      %p56 = por %p54, %p55
      %p57 = scmp.ne.s32.totalorder %s43, %s44
      %p58 = scmp.eq.s32.totalorder %s22, 1
      %p59 = por %p57, %p58
      %p61 = scmp.ne.s32.totalorder %s44, %s60
      %p62 = scmp.eq.s32.totalorder %s22, 0
      %p63 = por %p61, %p62
      %s65 = sadd.s32 %s64, 1
      %p68 = scmp.eq.s32.totalorder %s16, 1
      %p69 = scmp.ne.s32.totalorder %s64, %s66
      %p70 = scmp.eq.s32.totalorder %s16, 0
      %p71 = por %p69, %p70
      %p72 = scmp.ne.s32.totalorder %s64, %s66
      %p73 = scmp.eq.s32.totalorder %s21, 1
      %p74 = por %p72, %p73
      %p75 = scmp.ne.s32.totalorder %s66, %s67
      %p76 = scmp.eq.s32.totalorder %s21, 0
      %p77 = por %p75, %p76
      %p78 = scmp.ne.s32.totalorder %s66, %s67
      %p79 = scmp.eq.s32.totalorder %s22, 1
      %p80 = por %p78, %p79
      %p82 = scmp.ne.s32.totalorder %s67, %s81
      %p83 = scmp.eq.s32.totalorder %s22, 0
      %p84 = por %p82, %p83
      %s86 = sadd.s32 %s85, 1
      %p89 = scmp.eq.s32.totalorder %s16, 1
      %p90 = scmp.ne.s32.totalorder %s85, %s87
      %p91 = scmp.eq.s32.totalorder %s16, 0
      %p92 = por %p90, %p91
      %p93 = scmp.ne.s32.totalorder %s85, %s87
      %p94 = scmp.eq.s32.totalorder %s21, 1
      %p95 = por %p93, %p94
      %p96 = scmp.ne.s32.totalorder %s87, %s88
      %p97 = scmp.eq.s32.totalorder %s21, 0
      %p98 = por %p96, %p97
      %p99 = scmp.ne.s32.totalorder %s87, %s88
      %p100 = scmp.eq.s32.totalorder %s22, 1
      %p101 = por %p99, %p100
      %p103 = scmp.ne.s32.totalorder %s88, %s102
      %p104 = scmp.eq.s32.totalorder %s22, 0
      %p105 = por %p103, %p104
      %s107 = sadd.s32 %s106, 1
      %p110 = scmp.eq.s32.totalorder %s16, 1
      %p111 = scmp.ne.s32.totalorder %s106, %s108
      %p112 = scmp.eq.s32.totalorder %s16, 0
      %p113 = por %p111, %p112
      %p114 = scmp.ne.s32.totalorder %s106, %s108
      %p115 = scmp.eq.s32.totalorder %s21, 1
      %p116 = por %p114, %p115
      %p117 = scmp.ne.s32.totalorder %s108, %s109
      %p118 = scmp.eq.s32.totalorder %s21, 0
      %p119 = por %p117, %p118
      %p120 = scmp.ne.s32.totalorder %s108, %s109
      %p121 = scmp.eq.s32.totalorder %s22, 1
      %p122 = por %p120, %p121
      %p124 = scmp.ne.s32.totalorder %s109, %s123
      %p125 = scmp.eq.s32.totalorder %s22, 0
      %p126 = por %p124, %p125
      %s128 = sadd.s32 %s127, 1
      %p131 = scmp.eq.s32.totalorder %s16, 1
      %p132 = scmp.ne.s32.totalorder %s127, %s129
      %p133 = scmp.eq.s32.totalorder %s16, 0
      %p134 = por %p132, %p133
      %p135 = scmp.ne.s32.totalorder %s127, %s129
      %p136 = scmp.eq.s32.totalorder %s21, 1
      %p137 = por %p135, %p136
      %p138 = scmp.ne.s32.totalorder %s129, %s130
      %p139 = scmp.eq.s32.totalorder %s21, 0
      %p140 = por %p138, %p139
      %p141 = scmp.ne.s32.totalorder %s129, %s130
      %p142 = scmp.eq.s32.totalorder %s22, 1
      %p143 = por %p141, %p142
      %p145 = scmp.ne.s32.totalorder %s130, %s144
      %p146 = scmp.eq.s32.totalorder %s22, 0
      %p147 = por %p145, %p146
      %s149 = sadd.s32 %s148, 1
      %p152 = scmp.eq.s32.totalorder %s16, 1
      %p153 = scmp.ne.s32.totalorder %s148, %s150
      %p154 = scmp.eq.s32.totalorder %s16, 0
      %p155 = por %p153, %p154
      %p156 = scmp.ne.s32.totalorder %s148, %s150
      %p157 = scmp.eq.s32.totalorder %s21, 1
      %p158 = por %p156, %p157
      %p159 = scmp.ne.s32.totalorder %s150, %s151
      %p160 = scmp.eq.s32.totalorder %s21, 0
      %p161 = por %p159, %p160
      %p162 = scmp.ne.s32.totalorder %s150, %s151
      %p163 = scmp.eq.s32.totalorder %s22, 1
      %p164 = por %p162, %p163
      %p166 = scmp.ne.s32.totalorder %s151, %s165
      %p167 = scmp.eq.s32.totalorder %s22, 0
      %p168 = por %p166, %p167
      %s169 = ssub.s32 %s23, %s35
      %s170 = ssub.s32 %s24, %s31
      %s171 = sor.u32 %s169, %s170
      %p172 = scmp.eq.s32.totalorder %s171, 0
      %s174 = sadd.s32 %s173, 1
      %s175 = scalar_select %p172, %s173, %s174
      %p178 = pneg %p172
      %p179 = scmp.eq.s32.totalorder %s16, 1
      %p180 = por %p178, %p179
      %p181 = scmp.ne.s32.totalorder %s173, %s176
      %p182 = scmp.eq.s32.totalorder %s16, 0
      %p183 = por %p181, %p182
      %p184 = scmp.ne.s32.totalorder %s173, %s176
      %p185 = scmp.eq.s32.totalorder %s21, 1
      %p186 = por %p184, %p185
      %p187 = scmp.ne.s32.totalorder %s176, %s177
      %p188 = scmp.eq.s32.totalorder %s21, 0
      %p189 = por %p187, %p188
      %p190 = scmp.ne.s32.totalorder %s176, %s177
      %p191 = scmp.eq.s32.totalorder %s22, 1
      %p192 = por %p190, %p191
      %p194 = scmp.ne.s32.totalorder %s177, %s193
      %p195 = scmp.eq.s32.totalorder %s22, 0
      %p196 = por %p194, %p195
      %p197 = scmp.le.s32.totalorder 1, %s16
      %p198 = scmp.lt.s32.totalorder %s16, 3
      %p199 = pnand %p197, %p198
      %p200 = pneg %p199
      // Predicated region
      $region9: #{tpu_custom_call.1} parent=5 // pred_check
        _
      $region10: #{tpu_custom_call.1} parent=5 // pred_check_branch
        %202 = sbr.rel (%p199) target = $region12
      $region11: #{tpu_custom_call.1} parent=5 // pred_region
        %s203 = ssub.s32 %s16, 1
        // Predicated region
        $region13: #{tpu_custom_call.1} parent=11 // pred_check
          %p204 = pneg %p77
        $region14: #{tpu_custom_call.1} parent=11 // pred_check_branch
          %206 = sbr.rel (%p204) target = $region16
        $region15: #{tpu_custom_call.1} parent=11 // pred_region
          %208 = vsyncadd [#allocation5], 0
          %s209 = sshll.u32 %s1, 4
          %s210 = int_to_ptr.hbm [resolvable:$true] %s209
          %s211 = sshll.u32 [#allocation4], 4
          %s212 = int_to_ptr.vmem [resolvable:$true] %s211
          %217 = dma.hbm_to_vmem [thread:$0]  %s210, 256, %s212, [#allocation5], 128, 128, 8
        $region16: #{tpu_custom_call.1} parent=11 // pred_fallthru
          _
        // Predicated region
        $region17: #{tpu_custom_call.1} parent=11 // pred_check
          %p218 = pneg %p98
        $region18: #{tpu_custom_call.1} parent=11 // pred_check_branch
          %220 = sbr.rel (%p218) target = $region20
        $region19: #{tpu_custom_call.1} parent=11 // pred_region
          _
        $region20: #{tpu_custom_call.1} parent=11 // pred_fallthru
          _
        // Predicated region
        $region21: #{tpu_custom_call.1} parent=11 // pred_check
          %p221 = pneg %p119
        $region22: #{tpu_custom_call.1} parent=11 // pred_check_branch
          %223 = sbr.rel (%p221) target = $region24
        $region23: #{tpu_custom_call.1} parent=11 // pred_region
          _
        $region24: #{tpu_custom_call.1} parent=11 // pred_fallthru
          _
        // Predicated region
        $region25: #{tpu_custom_call.1} parent=11 // pred_check
          %p224 = pneg %p140
        $region26: #{tpu_custom_call.1} parent=11 // pred_check_branch
          %226 = sbr.rel (%p224) target = $region28
        $region27: #{tpu_custom_call.1} parent=11 // pred_region
          _
        $region28: #{tpu_custom_call.1} parent=11 // pred_fallthru
          _
        // Predicated region
        $region29: #{tpu_custom_call.1} parent=11 // pred_check
          %p227 = pneg %p161
        $region30: #{tpu_custom_call.1} parent=11 // pred_check_branch
          %229 = sbr.rel (%p227) target = $region32
        $region31: #{tpu_custom_call.1} parent=11 // pred_region
          _
        $region32: #{tpu_custom_call.1} parent=11 // pred_fallthru
          _
      $region12: #{tpu_custom_call.1} parent=5 // pred_fallthru
        _
      %p230 = scmp.lt.s32.totalorder %s16, 2
      // Predicated region
      $region33: #{tpu_custom_call.1} parent=5 // pred_check
        %p231 = pneg %p230
      $region34: #{tpu_custom_call.1} parent=5 // pred_check_branch
        %233 = sbr.rel (%p231) target = $region36
      $region35: #{tpu_custom_call.1} parent=5 // pred_region
        // Predicated region
        $region37: #{tpu_custom_call.1} parent=35 // pred_check
          %p234 = pneg %p50
        $region38: #{tpu_custom_call.1} parent=35 // pred_check_branch
          %236 = sbr.rel (%p234) target = $region40
        $region39: #{tpu_custom_call.1} parent=35 // pred_region
          %p237 = scmp.lt.s32.totalorder %s23, 1
          %s238 = scalar_select %p237, %s23, 1
          %p239 = scmp.lt.s32.totalorder %s24, 0
          %s240 = scalar_select %p239, %s24, 0
          %s241 = smul.addr %s238, 2
          %s242 = sadd.s32 %s240, %s241
          %s243 = smul.addr %s242, 4
          %s244 = scalar_lea.vmem %s0, %s243
        $region40: #{tpu_custom_call.1} parent=35 // pred_fallthru
          _
      $region36: #{tpu_custom_call.1} parent=5 // pred_fallthru
        _
      %p245 = scmp.le.s32.totalorder 1, %s16
      %p246 = scmp.lt.s32.totalorder %s16, 3
      %p247 = pnand %p245, %p246
      %p248 = pneg %p247
      // Predicated region
      $region41: #{tpu_custom_call.1} parent=5 // pred_check
        _
      $region42: #{tpu_custom_call.1} parent=5 // pred_check_branch
        %250 = sbr.rel (%p247) target = $region44
      $region43: #{tpu_custom_call.1} parent=5 // pred_region
        %s251 = ssub.s32 %s16, 1
        // Predicated region
        $region45: #{tpu_custom_call.1} parent=43 // pred_check
          %p252 = pneg %p77
        $region46: #{tpu_custom_call.1} parent=43 // pred_check_branch
          %254 = sbr.rel (%p252) target = $region48
        $region47: #{tpu_custom_call.1} parent=43 // pred_region
          %256 = dma.done [#allocation5], 256
        $region48: #{tpu_custom_call.1} parent=43 // pred_fallthru
          _
        %p257 = scmp.lt.s32.totalorder %s25, 1
        %s258 = scalar_select %p257, %s25, 1
        %p259 = scmp.lt.s32.totalorder %s26, 0
        %s260 = scalar_select %p259, %s26, 0
        %s261 = smul.addr %s258, 2
        %s262 = sadd.s32 %s260, %s261
        %s263 = smul.addr %s262, 4
        %s264 = scalar_lea.vmem %s0, %s263
        %p265 = pneg %p56
        %p266 = pneg %p53
        %p267 = pneg %p77
        %p268 = pneg %p74
        %p269 = pneg %p98
        %p270 = pneg %p95
        %p271 = pneg %p119
        %p272 = pneg %p116
        %p273 = pneg %p140
        %p274 = pneg %p137
        %p275 = pneg %p161
        %p276 = pneg %p158
        %p277 = pneg %p189
        %p278 = pneg %p186
        %s279 = sand.u32 %s176, 1
        %s280 = scalar_lea.sflag [#allocation6], %s279
        %s281 = sand.u32 %s176, 1
        %s282 = smul.addr %s281, 32
        %s283 = scalar_lea.vmem [#allocation7], %s282
        %p284 = scmp.lt.s32.totalorder %s25, 1
        %s285 = scalar_select %p284, %s25, 1
        %p286 = scmp.lt.s32.totalorder %s26, 0
        %s287 = scalar_select %p286, %s26, 0
        %s288 = smul.addr %s285, 2
        %s289 = sadd.s32 %s287, %s288
        %s290 = smul.addr %s289, 4
        %s291 = scalar_lea.vmem %s0, %s290
        %vm292 = vcmask 195584
        %293 = vst.msk [vmem:[#allocation2] sm:$0xff] %vm292, 0.0
        %vm294 = vcmask 15360
        %295 = vst.msk [vmem:[#allocation3] sm:$0xff] %vm294, 0.0
        %vm296 = vcmask 162960
        %297 = vst.msk [vmem:[#allocation3] sm:$0xff] %vm296, 0.0
        %v298 = vld [vmem:[#allocation4] sm:$0xff]
        %v299 = vld [vmem:[#allocation4 + $0x8] sm:$0xff]
        %v300 = vld [vmem:[%s3] sm:$0xff]
        %v301 = vld [vmem:[%s2] sm:$0xff]
        %v302 = vld [vmem:[%s4] sm:$0xff]
        %v303 = vld [vmem:[%s5] sm:$0xff]
        %v304 = vld [vmem:[%s291] sm:$0x1]
        %v305 = vld [vmem:[%s291 + $0x4] sm:$0x1]
        %v308 = vrot.slane %v305, 7
        %vm309 = vcmask 1041409
        %v310 = vsel %vm309, %v308, %v304
        %311 = vrot.lane.b32.xlu0 %v310, 4
        %v312 = vpop.permute.xlu0 %311
        %vm314 = vcmask 156704
        %315 = vst.msk [vmem:[#allocation2] sm:$0x3] %vm314, %v312
        %v316 = vld [vmem:[#allocation2] sm:$0xff]
        %318 = vrot.lane.b32.xlu0 %v316, 126
        %v319 = vpop.permute.xlu0 %318
        %321 = vrot.lane.b32.xlu0 %v316, 124
        %v322 = vpop.permute.xlu0 %321
        %324 = vrot.lane.b32.xlu0 %v316, 122
        %v325 = vpop.permute.xlu0 %324
        %327 = vrot.lane.b32.xlu0 %v316, 120
        %v328 = vpop.permute.xlu0 %327
        %vm330 = vcmask 326656
        %v332 = vsel %vm330, %v298, 0
        %v335 = vsel %vm330, %v299, 0
        %337 = vmatpush.msra.mxu0 0.0
        %338 = vmatpush.msra.mxu0 0.0
        %339 = vmatpush.msra.mxu0 0.0
        %340 = vmatpush.msra.mxu0 0.0
        %341 = vmatpush.msra.mxu0 0.0
        %342 = vmatpush.msra.mxu0 0.0
        %343 = vmatpush.msra.mxu0 0.0
        %344 = vmatpush.msra.mxu0 0.0
        %345 = vmatpush.msra.mxu0 0.0
        %346 = vmatpush.msra.mxu0 0.0
        %347 = vmatpush.msra.mxu0 0.0
        %348 = vmatpush.msra.mxu0 %v328
        %349 = vmatpush.msra.mxu0 %v325
        %350 = vmatpush.msra.mxu0 %v322
        %351 = vmatpush.msra.mxu0 %v319
        %352 = vmatpush.msra.mxu0 %v316
        %353 = vmatmul.f32.gmra.mxu0 %v332
        %v354 = vpop.f32.mrf.mxu0
        %v355 = vadd.f32 0.0, %v354
        %356 = vmatmul.f32.gmra.mxu0 %v335
        %v357 = vpop.f32.mrf.mxu0
        %v358 = vadd.f32 0.0, %v357
        %359 = vdwg.mxu0
        %361 = vset.pattern.permute.xlu0 0
        %362 = vperm.xlu0 %361, %v301
        %v363 = vpop.permute.xlu0 %362
        %v365 = vadd.f32 %v355, %v363
        %vm366 = vcmp.ge.f32.partialorder %v365, 0.0
        %v367 = vmul.f32 %v365, 0.01
        %v368 = vsel %vm366, %v365, %v367
        %370 = vrot.lane.b32.xlu0 %v368, 2
        %v371 = vpop.permute.xlu0 %370
        %vm373 = vcmask 146448
        %374 = vst.msk [vmem:[#allocation3] sm:$0xff] %vm373, %v371
        %v375 = vld [vmem:[#allocation3] sm:$0xff]
        %377 = vrot.lane.b32.xlu0 %v375, 127
        %v378 = vpop.permute.xlu0 %377
        %380 = vrot.lane.b32.xlu0 %v375, 126
        %v381 = vpop.permute.xlu0 %380
        %383 = vrot.lane.b32.xlu0 %v375, 125
        %v384 = vpop.permute.xlu0 %383
        %386 = vrot.lane.b32.xlu0 %v375, 124
        %v387 = vpop.permute.xlu0 %386
        %390 = vset.pattern.permute.xlu0 0
        %391 = vperm.xlu0 %390, %v302
        %v392 = vpop.permute.xlu0 %391
        %v395 = vsel %vm330, %v300, 0
        %397 = vmatpush.msra.mxu0 0.0
        %398 = vmatpush.msra.mxu0 0.0
        %399 = vmatpush.msra.mxu0 0.0
        %400 = vmatpush.msra.mxu0 0.0
        %401 = vmatpush.msra.mxu0 0.0
        %402 = vmatpush.msra.mxu0 0.0
        %403 = vmatpush.msra.mxu0 0.0
        %404 = vmatpush.msra.mxu0 0.0
        %405 = vmatpush.msra.mxu0 0.0
        %406 = vmatpush.msra.mxu0 0.0
        %407 = vmatpush.msra.mxu0 0.0
        %408 = vmatpush.msra.mxu0 %v387
        %409 = vmatpush.msra.mxu0 %v384
        %410 = vmatpush.msra.mxu0 %v381
        %411 = vmatpush.msra.mxu0 %v378
        %412 = vmatpush.msra.mxu0 %v375
        %413 = vmatmul.f32.gmra.mxu0 %v395
        %v414 = vpop.f32.mrf.mxu0
        %v415 = vadd.f32 %v392, %v414
        %416 = vdwg.mxu0
        %vm417 = vcmp.ge.f32.partialorder %v415, 0.0
        %v418 = vmul.f32 %v415, 0.01
        %v419 = vsel %vm417, %v415, %v418
        %v420 = vadd.f32 %v419, %v358
        %422 = vset.pattern.permute.xlu0 0
        %423 = vperm.xlu0 %422, %v303
        %v424 = vpop.permute.xlu0 %423
        %v426 = vadd.f32 %v420, %v424
        %v428 = vrot.slane %v426, 1
        %v429 = vrot.slane %v426, 2
        %v430 = vrot.slane %v426, 3
        %v431 = vrot.slane %v426, 4
        %v432 = vrot.slane %v426, 5
        %v433 = vrot.slane %v426, 6
        %v434 = vrot.slane %v426, 7
        %vm442 = vcmask 122880
        %443 = vst.msk [vmem:[%s283] sm:$0x1] %vm442, %v426
        %444 = vst.msk [vmem:[%s283 + $0x4] sm:$0x1] %vm442, %v428
        %445 = vst.msk [vmem:[%s283 + $0x8] sm:$0x1] %vm442, %v429
        %446 = vst.msk [vmem:[%s283 + $0xc] sm:$0x1] %vm442, %v430
        %447 = vst.msk [vmem:[%s283 + $0x10] sm:$0x1] %vm442, %v431
        %448 = vst.msk [vmem:[%s283 + $0x14] sm:$0x1] %vm442, %v432
        %449 = vst.msk [vmem:[%s283 + $0x18] sm:$0x1] %vm442, %v433
        %450 = vst.msk [vmem:[%s283 + $0x1c] sm:$0x1] %vm442, %v434
        %v451 = vld [vmem:[%s291 + $0x1] sm:$0x1]
        %v452 = vld [vmem:[%s291 + $0x5] sm:$0x1]
        %v455 = vrot.slane %v452, 7
        %v456 = vsel %vm309, %v455, %v451
        %457 = vrot.lane.b32.xlu0 %v456, 4
        %v458 = vpop.permute.xlu0 %457
        %460 = vst.msk [vmem:[#allocation2] sm:$0x3] %vm314, %v458
        %v461 = vld [vmem:[#allocation2] sm:$0xff]
        %463 = vrot.lane.b32.xlu0 %v461, 126
        %v464 = vpop.permute.xlu0 %463
        %466 = vrot.lane.b32.xlu0 %v461, 124
        %v467 = vpop.permute.xlu0 %466
        %469 = vrot.lane.b32.xlu0 %v461, 122
        %v470 = vpop.permute.xlu0 %469
        %472 = vrot.lane.b32.xlu0 %v461, 120
        %v473 = vpop.permute.xlu0 %472
        %475 = vmatpush.msra.mxu0 0.0
        %476 = vmatpush.msra.mxu0 0.0
        %477 = vmatpush.msra.mxu0 0.0
        %478 = vmatpush.msra.mxu0 0.0
        %479 = vmatpush.msra.mxu0 0.0
        %480 = vmatpush.msra.mxu0 0.0
        %481 = vmatpush.msra.mxu0 0.0
        %482 = vmatpush.msra.mxu0 0.0
        %483 = vmatpush.msra.mxu0 0.0
        %484 = vmatpush.msra.mxu0 0.0
        %485 = vmatpush.msra.mxu0 0.0
        %486 = vmatpush.msra.mxu0 %v473
        %487 = vmatpush.msra.mxu0 %v470
        %488 = vmatpush.msra.mxu0 %v467
        %489 = vmatpush.msra.mxu0 %v464
        %490 = vmatpush.msra.mxu0 %v461
        %491 = vmatmul.f32.gmra.mxu0 %v332
        %v492 = vpop.f32.mrf.mxu0
        %v493 = vadd.f32 0.0, %v492
        %494 = vmatmul.f32.gmra.mxu0 %v335
        %v495 = vpop.f32.mrf.mxu0
        %v496 = vadd.f32 0.0, %v495
        %497 = vdwg.mxu0
        %v498 = vadd.f32 %v493, %v363
        %vm499 = vcmp.ge.f32.partialorder %v498, 0.0
        %v500 = vmul.f32 %v498, 0.01
        %v501 = vsel %vm499, %v498, %v500
        %503 = vrot.lane.b32.xlu0 %v501, 2
        %v504 = vpop.permute.xlu0 %503
        %506 = vst.msk [vmem:[#allocation3] sm:$0xff] %vm373, %v504
        %v507 = vld [vmem:[#allocation3] sm:$0xff]
        %509 = vrot.lane.b32.xlu0 %v507, 127
        %v510 = vpop.permute.xlu0 %509
        %512 = vrot.lane.b32.xlu0 %v507, 126
        %v513 = vpop.permute.xlu0 %512
        %515 = vrot.lane.b32.xlu0 %v507, 125
        %v516 = vpop.permute.xlu0 %515
        %518 = vrot.lane.b32.xlu0 %v507, 124
        %v519 = vpop.permute.xlu0 %518
        %521 = vmatpush.msra.mxu0 0.0
        %522 = vmatpush.msra.mxu0 0.0
        %523 = vmatpush.msra.mxu0 0.0
        %524 = vmatpush.msra.mxu0 0.0
        %525 = vmatpush.msra.mxu0 0.0
        %526 = vmatpush.msra.mxu0 0.0
        %527 = vmatpush.msra.mxu0 0.0
        %528 = vmatpush.msra.mxu0 0.0
        %529 = vmatpush.msra.mxu0 0.0
        %530 = vmatpush.msra.mxu0 0.0
        %531 = vmatpush.msra.mxu0 0.0
        %532 = vmatpush.msra.mxu0 %v519
        %533 = vmatpush.msra.mxu0 %v516
        %534 = vmatpush.msra.mxu0 %v513
        %535 = vmatpush.msra.mxu0 %v510
        %536 = vmatpush.msra.mxu0 %v507
        %537 = vmatmul.f32.gmra.mxu0 %v395
        %v538 = vpop.f32.mrf.mxu0
        %v539 = vadd.f32 %v392, %v538
        %540 = vdwg.mxu0
        %vm541 = vcmp.ge.f32.partialorder %v539, 0.0
        %v542 = vmul.f32 %v539, 0.01
        %v543 = vsel %vm541, %v539, %v542
        %v544 = vadd.f32 %v543, %v496
        %v545 = vadd.f32 %v544, %v424
        %v547 = vrot.slane %v545, 1
        %v548 = vrot.slane %v545, 2
        %v549 = vrot.slane %v545, 3
        %v550 = vrot.slane %v545, 4
        %v551 = vrot.slane %v545, 5
        %v552 = vrot.slane %v545, 6
        %v553 = vrot.slane %v545, 7
        %561 = vst.msk [vmem:[%s283 + $0x1] sm:$0x1] %vm442, %v545
        %562 = vst.msk [vmem:[%s283 + $0x5] sm:$0x1] %vm442, %v547
        %563 = vst.msk [vmem:[%s283 + $0x9] sm:$0x1] %vm442, %v548
        %564 = vst.msk [vmem:[%s283 + $0xd] sm:$0x1] %vm442, %v549
        %565 = vst.msk [vmem:[%s283 + $0x11] sm:$0x1] %vm442, %v550
        %566 = vst.msk [vmem:[%s283 + $0x15] sm:$0x1] %vm442, %v551
        %567 = vst.msk [vmem:[%s283 + $0x19] sm:$0x1] %vm442, %v552
        %568 = vst.msk [vmem:[%s283 + $0x1d] sm:$0x1] %vm442, %v553
        %v569 = vld [vmem:[%s291 + $0x2] sm:$0x1]
        %v570 = vld [vmem:[%s291 + $0x6] sm:$0x1]
        %v573 = vrot.slane %v570, 7
        %v574 = vsel %vm309, %v573, %v569
        %575 = vrot.lane.b32.xlu0 %v574, 4
        %v576 = vpop.permute.xlu0 %575
        %578 = vst.msk [vmem:[#allocation2] sm:$0x3] %vm314, %v576
        %v579 = vld [vmem:[#allocation2] sm:$0xff]
        %581 = vrot.lane.b32.xlu0 %v579, 126
        %v582 = vpop.permute.xlu0 %581
        %584 = vrot.lane.b32.xlu0 %v579, 124
        %v585 = vpop.permute.xlu0 %584
        %587 = vrot.lane.b32.xlu0 %v579, 122
        %v588 = vpop.permute.xlu0 %587
        %590 = vrot.lane.b32.xlu0 %v579, 120
        %v591 = vpop.permute.xlu0 %590
        %593 = vmatpush.msra.mxu0 0.0
        %594 = vmatpush.msra.mxu0 0.0
        %595 = vmatpush.msra.mxu0 0.0
        %596 = vmatpush.msra.mxu0 0.0
        %597 = vmatpush.msra.mxu0 0.0
        %598 = vmatpush.msra.mxu0 0.0
        %599 = vmatpush.msra.mxu0 0.0
        %600 = vmatpush.msra.mxu0 0.0
        %601 = vmatpush.msra.mxu0 0.0
        %602 = vmatpush.msra.mxu0 0.0
        %603 = vmatpush.msra.mxu0 0.0
        %604 = vmatpush.msra.mxu0 %v591
        %605 = vmatpush.msra.mxu0 %v588
        %606 = vmatpush.msra.mxu0 %v585
        %607 = vmatpush.msra.mxu0 %v582
        %608 = vmatpush.msra.mxu0 %v579
        %609 = vmatmul.f32.gmra.mxu0 %v332
        %v610 = vpop.f32.mrf.mxu0
        %v611 = vadd.f32 0.0, %v610
        %612 = vmatmul.f32.gmra.mxu0 %v335
        %v613 = vpop.f32.mrf.mxu0
        %v614 = vadd.f32 0.0, %v613
        %615 = vdwg.mxu0
        %v616 = vadd.f32 %v611, %v363
        %vm617 = vcmp.ge.f32.partialorder %v616, 0.0
        %v618 = vmul.f32 %v616, 0.01
        %v619 = vsel %vm617, %v616, %v618
        %621 = vrot.lane.b32.xlu0 %v619, 2
        %v622 = vpop.permute.xlu0 %621
        %624 = vst.msk [vmem:[#allocation3] sm:$0xff] %vm373, %v622
        %v625 = vld [vmem:[#allocation3] sm:$0xff]
        %627 = vrot.lane.b32.xlu0 %v625, 127
        %v628 = vpop.permute.xlu0 %627
        %630 = vrot.lane.b32.xlu0 %v625, 126
        %v631 = vpop.permute.xlu0 %630
        %633 = vrot.lane.b32.xlu0 %v625, 125
        %v634 = vpop.permute.xlu0 %633
        %636 = vrot.lane.b32.xlu0 %v625, 124
        %v637 = vpop.permute.xlu0 %636
        %639 = vmatpush.msra.mxu0 0.0
        %640 = vmatpush.msra.mxu0 0.0
        %641 = vmatpush.msra.mxu0 0.0
        %642 = vmatpush.msra.mxu0 0.0
        %643 = vmatpush.msra.mxu0 0.0
        %644 = vmatpush.msra.mxu0 0.0
        %645 = vmatpush.msra.mxu0 0.0
        %646 = vmatpush.msra.mxu0 0.0
        %647 = vmatpush.msra.mxu0 0.0
        %648 = vmatpush.msra.mxu0 0.0
        %649 = vmatpush.msra.mxu0 0.0
        %650 = vmatpush.msra.mxu0 %v637
        %651 = vmatpush.msra.mxu0 %v634
        %652 = vmatpush.msra.mxu0 %v631
        %653 = vmatpush.msra.mxu0 %v628
        %654 = vmatpush.msra.mxu0 %v625
        %655 = vmatmul.f32.gmra.mxu0 %v395
        %v656 = vpop.f32.mrf.mxu0
        %v657 = vadd.f32 %v392, %v656
        %658 = vdwg.mxu0
        %vm659 = vcmp.ge.f32.partialorder %v657, 0.0
        %v660 = vmul.f32 %v657, 0.01
        %v661 = vsel %vm659, %v657, %v660
        %v662 = vadd.f32 %v661, %v614
        %v663 = vadd.f32 %v662, %v424
        %v665 = vrot.slane %v663, 1
        %v666 = vrot.slane %v663, 2
        %v667 = vrot.slane %v663, 3
        %v668 = vrot.slane %v663, 4
        %v669 = vrot.slane %v663, 5
        %v670 = vrot.slane %v663, 6
        %v671 = vrot.slane %v663, 7
        %679 = vst.msk [vmem:[%s283 + $0x2] sm:$0x1] %vm442, %v663
        %680 = vst.msk [vmem:[%s283 + $0x6] sm:$0x1] %vm442, %v665
        %681 = vst.msk [vmem:[%s283 + $0xa] sm:$0x1] %vm442, %v666
        %682 = vst.msk [vmem:[%s283 + $0xe] sm:$0x1] %vm442, %v667
        %683 = vst.msk [vmem:[%s283 + $0x12] sm:$0x1] %vm442, %v668
        %684 = vst.msk [vmem:[%s283 + $0x16] sm:$0x1] %vm442, %v669
        %685 = vst.msk [vmem:[%s283 + $0x1a] sm:$0x1] %vm442, %v670
        %686 = vst.msk [vmem:[%s283 + $0x1e] sm:$0x1] %vm442, %v671
        %v687 = vld [vmem:[%s291 + $0x3] sm:$0x1]
        %v688 = vld [vmem:[%s291 + $0x7] sm:$0x1]
        %v691 = vrot.slane %v688, 7
        %v692 = vsel %vm309, %v691, %v687
        %693 = vrot.lane.b32.xlu0 %v692, 4
        %v694 = vpop.permute.xlu0 %693
        %696 = vst.msk [vmem:[#allocation2] sm:$0x3] %vm314, %v694
        %v697 = vld [vmem:[#allocation2] sm:$0xff]
        %699 = vrot.lane.b32.xlu0 %v697, 126
        %v700 = vpop.permute.xlu0 %699
        %702 = vrot.lane.b32.xlu0 %v697, 124
        %v703 = vpop.permute.xlu0 %702
        %705 = vrot.lane.b32.xlu0 %v697, 122
        %v706 = vpop.permute.xlu0 %705
        %708 = vrot.lane.b32.xlu0 %v697, 120
        %v709 = vpop.permute.xlu0 %708
        %711 = vmatpush.msra.mxu0 0.0
        %712 = vmatpush.msra.mxu0 0.0
        %713 = vmatpush.msra.mxu0 0.0
        %714 = vmatpush.msra.mxu0 0.0
        %715 = vmatpush.msra.mxu0 0.0
        %716 = vmatpush.msra.mxu0 0.0
        %717 = vmatpush.msra.mxu0 0.0
        %718 = vmatpush.msra.mxu0 0.0
        %719 = vmatpush.msra.mxu0 0.0
        %720 = vmatpush.msra.mxu0 0.0
        %721 = vmatpush.msra.mxu0 0.0
        %722 = vmatpush.msra.mxu0 %v709
        %723 = vmatpush.msra.mxu0 %v706
        %724 = vmatpush.msra.mxu0 %v703
        %725 = vmatpush.msra.mxu0 %v700
        %726 = vmatpush.msra.mxu0 %v697
        %727 = vmatmul.f32.gmra.mxu0 %v332
        %v728 = vpop.f32.mrf.mxu0
        %v729 = vadd.f32 0.0, %v728
        %730 = vmatmul.f32.gmra.mxu0 %v335
        %v731 = vpop.f32.mrf.mxu0
        %v732 = vadd.f32 0.0, %v731
        %733 = vdwg.mxu0
        %v734 = vadd.f32 %v729, %v363
        %vm735 = vcmp.ge.f32.partialorder %v734, 0.0
        %v736 = vmul.f32 %v734, 0.01
        %v737 = vsel %vm735, %v734, %v736
        %739 = vrot.lane.b32.xlu0 %v737, 2
        %v740 = vpop.permute.xlu0 %739
        %742 = vst.msk [vmem:[#allocation3] sm:$0xff] %vm373, %v740
        %v743 = vld [vmem:[#allocation3] sm:$0xff]
        %745 = vrot.lane.b32.xlu0 %v743, 127
        %v746 = vpop.permute.xlu0 %745
        %748 = vrot.lane.b32.xlu0 %v743, 126
        %v749 = vpop.permute.xlu0 %748
        %751 = vrot.lane.b32.xlu0 %v743, 125
        %v752 = vpop.permute.xlu0 %751
        %754 = vrot.lane.b32.xlu0 %v743, 124
        %v755 = vpop.permute.xlu0 %754
        %757 = vmatpush.msra.mxu0 0.0
        %758 = vmatpush.msra.mxu0 0.0
        %759 = vmatpush.msra.mxu0 0.0
        %760 = vmatpush.msra.mxu0 0.0
        %761 = vmatpush.msra.mxu0 0.0
        %762 = vmatpush.msra.mxu0 0.0
        %763 = vmatpush.msra.mxu0 0.0
        %764 = vmatpush.msra.mxu0 0.0
        %765 = vmatpush.msra.mxu0 0.0
        %766 = vmatpush.msra.mxu0 0.0
        %767 = vmatpush.msra.mxu0 0.0
        %768 = vmatpush.msra.mxu0 %v755
        %769 = vmatpush.msra.mxu0 %v752
        %770 = vmatpush.msra.mxu0 %v749
        %771 = vmatpush.msra.mxu0 %v746
        %772 = vmatpush.msra.mxu0 %v743
        %773 = vmatmul.f32.gmra.mxu0 %v395
        %v774 = vpop.f32.mrf.mxu0
        %v775 = vadd.f32 %v392, %v774
        %776 = vdwg.mxu0
        %vm777 = vcmp.ge.f32.partialorder %v775, 0.0
        %v778 = vmul.f32 %v775, 0.01
        %v779 = vsel %vm777, %v775, %v778
        %v780 = vadd.f32 %v779, %v732
        %v781 = vadd.f32 %v780, %v424
        %v783 = vrot.slane %v781, 1
        %v784 = vrot.slane %v781, 2
        %v785 = vrot.slane %v781, 3
        %v786 = vrot.slane %v781, 4
        %v787 = vrot.slane %v781, 5
        %v788 = vrot.slane %v781, 6
        %v789 = vrot.slane %v781, 7
        %797 = vst.msk [vmem:[%s283 + $0x3] sm:$0x1] %vm442, %v781
        %798 = vst.msk [vmem:[%s283 + $0x7] sm:$0x1] %vm442, %v783
        %799 = vst.msk [vmem:[%s283 + $0xb] sm:$0x1] %vm442, %v784
        %800 = vst.msk [vmem:[%s283 + $0xf] sm:$0x1] %vm442, %v785
        %801 = vst.msk [vmem:[%s283 + $0x13] sm:$0x1] %vm442, %v786
        %802 = vst.msk [vmem:[%s283 + $0x17] sm:$0x1] %vm442, %v787
        %803 = vst.msk [vmem:[%s283 + $0x1b] sm:$0x1] %vm442, %v788
        %804 = vst.msk [vmem:[%s283 + $0x1f] sm:$0x1] %vm442, %v789
        %s805 = sand.u32 %s176, 1
        %s806 = scalar_lea.sflag [#allocation6], %s805
        %s807 = sand.u32 %s176, 1
        %s808 = smul.addr %s807, 32
        %s809 = scalar_lea.vmem [#allocation7], %s808
        // Predicated region
        $region49: #{tpu_custom_call.1} parent=43 // pred_check
          %p810 = pneg %p186
        $region50: #{tpu_custom_call.1} parent=43 // pred_check_branch
          %812 = sbr.rel (%p810) target = $region52
        $region51: #{tpu_custom_call.1} parent=43 // pred_region
          %814 = vsyncadd %s806, 0
          %s815 = smul.addr %s25, 8
          %s816 = sadd.s32 %s26, %s815
          %s817 = smul.addr %s816, 4
          %s818 = scalar_lea.hbm %s6, %s817
          %s819 = sshll.u32 %s809, 4
          %s820 = int_to_ptr.vmem [resolvable:$true] %s819
          %s821 = sshll.u32 %s818, 4
          %s822 = int_to_ptr.hbm [resolvable:$true] %s821
          %827 = dma.vmem_to_hbm [thread:$0]  %s820, 512, %s822, %s806, 64, 64, 4
        $region52: #{tpu_custom_call.1} parent=43 // pred_fallthru
          _
      $region44: #{tpu_custom_call.1} parent=5 // pred_fallthru
        _
      %p828 = scmp.le.s32.totalorder 2, %s16
      // Predicated region
      $region53: #{tpu_custom_call.1} parent=5 // pred_check
        %p829 = pneg %p828
      $region54: #{tpu_custom_call.1} parent=5 // pred_check_branch
        %831 = sbr.rel (%p829) target = $region56
      $region55: #{tpu_custom_call.1} parent=5 // pred_region
        %s832 = ssub.s32 %s16, 2
        // Predicated region
        $region57: #{tpu_custom_call.1} parent=55 // pred_check
          %p833 = pneg %p192
        $region58: #{tpu_custom_call.1} parent=55 // pred_check_branch
          %835 = sbr.rel (%p833) target = $region60
        $region59: #{tpu_custom_call.1} parent=55 // pred_region
          %s836 = sand.u32 %s177, 1
          %s837 = scalar_lea.sflag [#allocation6], %s836
          %s838 = sand.u32 %s177, 1
          %s839 = smul.addr %s838, 32
          %s840 = scalar_lea.vmem [#allocation7], %s839
          %842 = dma.done %s837, 512
        $region60: #{tpu_custom_call.1} parent=55 // pred_fallthru
          _
      $region56: #{tpu_custom_call.1} parent=5 // pred_fallthru
        _
    $region6: #{tpu_custom_call.1} parent=1 // loop_footer
      %s20 = sadd.s32 1, %s16
    $region7: #{tpu_custom_call.1} parent=1 // loop_footer_branch
      %15 = sbr.rel target = $region3
    $region8: #{tpu_custom_call.1} parent=1 // loop_exit
      _
    %843 = vsyncpa [#allocation5], 1
    %s844 = scalar_lea.sflag [#allocation5], 1
    %845 = vsyncpa %s844, 1
    %846 = vsyncpa [#allocation6], 1
    %s847 = scalar_lea.sflag [#allocation6], 1
    %848 = vsyncpa %s847, 1

</llo_original>
